<compile_context>
chip_gen: v7x
topology: tpu7x:2x2x1
jax: 0.10.0
libtpu: 0.0.40
codegen_flags: <defaults>
</compile_context>

<pallas_src>
import functools

import jax
import jax.numpy as jnp
import numpy as np
from jax import lax
from jax.experimental import pallas as pl
from jax.experimental.pallas import tpu as pltpu

D_MODEL = 32
DROPOUT_P = 0.1
BN_EPS = 1e-5

_LANES = 128
_KEEP_SCALE = 1.0 / (1.0 - DROPOUT_P) if DROPOUT_P < 1.0 else 0.0
_DROP_THRESH = int(round(DROPOUT_P * (1 << 31)))   # compare vs uniform in [0, 2^31)

_SMALL_MAX_PACKED_ROWS = 2048   # single-pass (fully VMEM-resident) at or below this
_TILE_ROWS = 1024               # packed-row tile for the streaming two-pass path
_NUM_STAT_SLABS = 2             # leading "parallel" axis of pass 1 (v7x megacore split)


def _cdiv(a, b):
    return -(-a // b)


def _dropout_residual(x, s, seed, row_offset):
    """pre = x + dropout(s) for f32 tiles of shape (rows, 128).

    Keep/drop is a cheap 2-multiply integer hash of the global flat element index and the
    seed (deterministic, evaluated exactly once per element in this implementation)."""
    shape = x.shape
    rows = lax.broadcasted_iota(jnp.int32, shape, 0)
    lanes = lax.broadcasted_iota(jnp.int32, shape, 1)
    # Lane packing is a contiguous reshape, so row*128 + lane == flat index of the (N, D) view.
    idx = ((rows + row_offset) * shape[1] + lanes).astype(jnp.uint32)
    h = (idx + seed.astype(jnp.uint32)) * jnp.uint32(0x9E3779B9)
    h = h ^ (h >> jnp.uint32(16))
    h = h * jnp.uint32(0x85EBCA6B)
    r = (h >> jnp.uint32(1)).astype(jnp.int32)            # uniform in [0, 2^31)
    keep = r >= jnp.int32(_DROP_THRESH)
    return x + jnp.where(keep, s * jnp.float32(_KEEP_SCALE), jnp.float32(0.0))


# --------------------------------------------------------------------------------------
# Single-pass path: whole packed tensor resident in VMEM (one launch, x/s read once).
# --------------------------------------------------------------------------------------
def _fused_kernel(seed_ref, x_ref, s_ref, gb_ref, o_ref, *, n_true, d_model):
    x = x_ref[...].astype(jnp.float32)
    s = s_ref[...].astype(jnp.float32)
    pre = _dropout_residual(x, s, seed_ref[0], 0)

    # Per-lane sum / sum-of-squares (padded zero rows contribute nothing; divide by true N).
    stacked = jnp.concatenate(
        [jnp.sum(pre, axis=0, keepdims=True),
         jnp.sum(pre * pre, axis=0, keepdims=True)], axis=0)          # (2, 128)

    # Fold the 128/d_model lane groups into per-channel totals, already broadcast back to
    # every lane, with one tiny matmul on the otherwise idle MXU:
    #   fold[l, j] = 1  iff  l == j (mod d_model)
    li = lax.broadcasted_iota(jnp.int32, (_LANES, _LANES), 0)
    lj = lax.broadcasted_iota(jnp.int32, (_LANES, _LANES), 1)
    fold = (li % d_model == lj % d_model).astype(jnp.float32)
    folded = jnp.dot(stacked, fold, preferred_element_type=jnp.float32)  # (2, 128)

    inv_n = jnp.float32(1.0 / n_true)
    mean = folded[0:1, :] * inv_n
    var = jnp.maximum(folded[1:2, :] * inv_n - mean * mean, 0.0)      # biased variance
    inv_std = lax.rsqrt(var + jnp.float32(BN_EPS))
    scale = gb_ref[0:1, :] * inv_std                                  # gamma * inv_std
    shift = gb_ref[1:2, :] - mean * scale                             # beta - mean * scale
    o_ref[...] = (pre * scale + shift).astype(o_ref.dtype)


# --------------------------------------------------------------------------------------
# Streaming path, pass 1: stats accumulation + materialize pre = x + dropout(s).
# --------------------------------------------------------------------------------------
def _stats_pre_kernel(seed_ref, x_ref, s_ref, stat_ref, pre_ref, *,
                      tile_rows, n_packed, tiles_per_core, grid_r):
    c = pl.program_id(0)
    t = pl.program_id(1)

    @pl.when(t == 0)
    def _init():
        stat_ref[...] = jnp.zeros_like(stat_ref)

    tile_raw = c * tiles_per_core + t
    tile_id = jnp.minimum(tile_raw, grid_r - 1)      # same clamp as the index maps
    row_off = tile_id * tile_rows

    x = x_ref[...].astype(jnp.float32)
    s = s_ref[...].astype(jnp.float32)
    pre = _dropout_residual(x, s, seed_ref[0], row_off)
    pre_ref[...] = pre.astype(pre_ref.dtype)         # OOB rows of a partial tile are dropped

    # Zero contributions from (a) rows past the array end in the partial last tile and
    # (b) the whole tile when this step is the clamped duplicate of the last tile.
    rows = lax.broadcasted_iota(jnp.int32, pre.shape, 0) + row_off
    valid = jnp.logical_and(rows < n_packed, tile_raw < grid_r)
    prem = jnp.where(valid, pre, jnp.float32(0.0))
    stat_ref[...] += jnp.concatenate(
        [jnp.sum(prem, axis=0, keepdims=True),
         jnp.sum(prem * prem, axis=0, keepdims=True)], axis=0)


# --------------------------------------------------------------------------------------
# Streaming path, pass 2: trivial FMA stream  out = pre * scale + shift.
# --------------------------------------------------------------------------------------
def _norm_kernel(pre_ref, ss_ref, o_ref):
    pre = pre_ref[...].astype(jnp.float32)
    o_ref[...] = (pre * ss_ref[0:1, :] + ss_ref[1:2, :]).astype(o_ref.dtype)


def residual_batch_cross_connection(x, sublayer_out, gamma, beta, seed):
    """x, sublayer_out: (B, S, D); gamma, beta: (D,); seed: python int."""
    B, S, D = x.shape
    assert D == D_MODEL and _LANES % D == 0
    pack = _LANES // D
    N = B * S
    dtype = x.dtype

    # Lane-dense packing: fold `pack` consecutive rows into the 128-lane dim.  This is a
    # contiguous (free) reshape; a real copy only happens in the rare N % pack != 0 case.
    n_rows_pad = _cdiv(N, pack) * pack
    xf = x.reshape(N, D)
    sf = sublayer_out.reshape(N, D).astype(dtype)
    if n_rows_pad != N:
        pad = ((0, n_rows_pad - N), (0, 0))
        xf = jnp.pad(xf, pad)
        sf = jnp.pad(sf, pad)
    n_packed = n_rows_pad // pack
    xp = xf.reshape(n_packed, _LANES)
    sp = sf.reshape(n_packed, _LANES)

    seed_arr = jnp.array([seed], dtype=jnp.int32)
    gamma_t = jnp.tile(gamma.astype(jnp.float32), pack)     # (128,)
    beta_t = jnp.tile(beta.astype(jnp.float32), pack)

    if n_packed <= _SMALL_MAX_PACKED_ROWS:
        # ---- single pass: one launch, x/s read once, out written once ----
        gb = jnp.stack([gamma_t, beta_t])                   # (2, 128) f32
        full_spec = pl.BlockSpec((n_packed, _LANES), lambda i, seed: (0, 0))
        gb_spec = pl.BlockSpec((2, _LANES), lambda i, seed: (0, 0))
        out = pl.pallas_call(
            functools.partial(_fused_kernel, n_true=N, d_model=D),
            out_shape=jax.ShapeDtypeStruct((n_packed, _LANES), dtype),
            grid_spec=pltpu.PrefetchScalarGridSpec(
                num_scalar_prefetch=1,                      # seed lives in SMEM
                grid=(1,),
                in_specs=[full_spec, full_spec, gb_spec],
                out_specs=full_spec,
            ),
            compiler_params=pltpu.CompilerParams(
                dimension_semantics=("arbitrary",),
                vmem_limit_bytes=32 * 1024 * 1024),
        )(seed_arr, xp, sp, gb)
    else:
        # ---- streaming two-pass path ----
        tile_rows = _TILE_ROWS
        grid_r = _cdiv(n_packed, tile_rows)   # last tile may be partial (masked in-kernel)
        nc = _NUM_STAT_SLABS
        t1 = _cdiv(grid_r, nc)                # row tiles per core (last one may duplicate)

        def row_map(c, t, seed):
            return (jnp.minimum(c * t1 + t, grid_r - 1), 0)

        row_spec = pl.BlockSpec((tile_rows, _LANES), row_map)
        stat_spec = pl.BlockSpec((None, 2, _LANES), lambda c, t, seed: (c, 0, 0))

        stats, pre = pl.pallas_call(
            functools.partial(_stats_pre_kernel, tile_rows=tile_rows,
                              n_packed=n_packed, tiles_per_core=t1, grid_r=grid_r),
            out_shape=(jax.ShapeDtypeStruct((nc, 2, _LANES), jnp.float32),
                       jax.ShapeDtypeStruct((n_packed, _LANES), dtype)),
            grid_spec=pltpu.PrefetchScalarGridSpec(
                num_scalar_prefetch=1,
                grid=(nc, t1),
                in_specs=[row_spec, row_spec],
                out_specs=[stat_spec, row_spec],
            ),
            compiler_params=pltpu.CompilerParams(
                dimension_semantics=("parallel", "arbitrary")),
        )(seed_arr, xp, sp)

        # Tiny JAX glue: fold core slabs + lane groups, bake BN into per-lane scale/shift.
        sums = stats.sum(axis=0).reshape(2, pack, D).sum(axis=1)      # (2, D)
        mean = sums[0] / N
        var = jnp.maximum(sums[1] / N - mean * mean, 0.0)             # biased variance
        inv_std = lax.rsqrt(var + jnp.float32(BN_EPS))
        scale_c = gamma.astype(jnp.float32) * inv_std
        shift_c = beta.astype(jnp.float32) - mean * scale_c
        ss = jnp.stack([jnp.tile(scale_c, pack), jnp.tile(shift_c, pack)])   # (2, 128)

        out = pl.pallas_call(
            _norm_kernel,
            out_shape=jax.ShapeDtypeStruct((n_packed, _LANES), dtype),
            grid=(grid_r,),
            in_specs=[pl.BlockSpec((tile_rows, _LANES), lambda t: (t, 0)),
                      pl.BlockSpec((2, _LANES), lambda t: (0, 0))],
            out_specs=pl.BlockSpec((tile_rows, _LANES), lambda t: (t, 0)),
            compiler_params=pltpu.CompilerParams(
                dimension_semantics=("parallel",)),
        )(pre, ss)

    if n_rows_pad != N:
        return out.reshape(n_rows_pad, D)[:N].reshape(B, S, D)
    return out.reshape(B, S, D)


if __name__ == "__main__":
    def sublayer(x, y, wx, wy):
        # Example sublayer (plain JAX glue): simple cross-mixing of x and y.
        return jnp.tanh(x @ wx + y @ wy)

    def run_case(B, S, seed):
        key = jax.random.PRNGKey(0)
        kx, ky, kwx, kwy = jax.random.split(key, 4)
        x = jax.random.normal(kx, (B, S, D_MODEL), dtype=jnp.float32)
        y = jax.random.normal(ky, (B, S, D_MODEL), dtype=jnp.float32)
        wx = jax.random.normal(kwx, (D_MODEL, D_MODEL), jnp.float32) / np.sqrt(D_MODEL)
        wy = jax.random.normal(kwy, (D_MODEL, D_MODEL), jnp.float32) / np.sqrt(D_MODEL)
        s_out = sublayer(x, y, wx, wy)

        # BatchNorm1d affine parameters (PyTorch default init: weight=1, bias=0).
        gamma = jnp.ones((D_MODEL,), dtype=jnp.float32)
        beta = jnp.zeros((D_MODEL,), dtype=jnp.float32)

        out = residual_batch_cross_connection(x, s_out, gamma, beta, seed=seed)
        out = jax.block_until_ready(out)

        flat = np.asarray(out).reshape(B * S, D_MODEL)
        assert out.shape == (B, S, D_MODEL)
        assert np.all(np.isfinite(flat))
        # Training-mode BN output: per-channel mean ~ beta (=0), biased var ~ gamma^2 (=1).
        assert np.allclose(flat.mean(axis=0), 0.0, atol=1e-3)
        assert np.allclose(flat.var(axis=0), 1.0, atol=1e-2)

    run_case(2, 8, seed=1234)     # single-pass, VMEM-resident path (required small shape)
    run_case(16, 640, seed=42)    # streaming two-pass path (partial last tile + odd tile count)
    print("KERNEL_OK")
</pallas_src>

<mosaic_0001>
module attributes {stable_mosaic.version = 11 : i64} {
  func.func @_fused_kernel(%arg0: i32, %arg1: memref<1xi32, #tpu.memory_space<smem>>, %arg2: memref<4x128xf32, #tpu.memory_space<vmem>>, %arg3: memref<4x128xf32, #tpu.memory_space<vmem>>, %arg4: memref<2x128xf32, #tpu.memory_space<vmem>>, %arg5: memref<4x128xf32, #tpu.memory_space<vmem>>) attributes {dimension_semantics = [#tpu.dimension_semantics<arbitrary>], iteration_bounds = array<i64: 1>, scalar_prefetch = 1 : i64, scratch_operands = 0 : i64, tpu.core_type = #tpu.core_type<tc>, window_params = [{pipeline_mode = #tpu.pipeline_mode<synchronous>, transform_indices = @transform_0, window_bounds = array<i64: 4, 128>}, {pipeline_mode = #tpu.pipeline_mode<synchronous>, transform_indices = @transform_1, window_bounds = array<i64: 4, 128>}, {pipeline_mode = #tpu.pipeline_mode<synchronous>, transform_indices = @transform_2, window_bounds = array<i64: 2, 128>}, {pipeline_mode = #tpu.pipeline_mode<synchronous>, transform_indices = @transform_3, window_bounds = array<i64: 4, 128>}]} {
    %c0 = arith.constant 0 : index
    %c0_0 = arith.constant 0 : index
    %0 = vector.load %arg2[%c0, %c0_0] : memref<4x128xf32, #tpu.memory_space<vmem>>, vector<4x128xf32>
    %c0_1 = arith.constant 0 : index
    %c0_2 = arith.constant 0 : index
    %1 = vector.load %arg3[%c0_1, %c0_2] : memref<4x128xf32, #tpu.memory_space<vmem>>, vector<4x128xf32>
    %c0_3 = arith.constant 0 : index
    %2 = memref.load %arg1[%c0_3] : memref<1xi32, #tpu.memory_space<smem>>
    %3 = tpu.iota {dimensions = array<i32: 0>} : vector<4x128xi32>
    %4 = tpu.iota {dimensions = array<i32: 1>} : vector<4x128xi32>
    %c0_i32 = arith.constant 0 : i32
    %5 = vector.broadcast %c0_i32 : i32 to vector<4x128xi32>
    %6 = arith.addi %3, %5 : vector<4x128xi32>
    %c128_i32 = arith.constant 128 : i32
    %7 = vector.broadcast %c128_i32 : i32 to vector<4x128xi32>
    %8 = arith.muli %6, %7 : vector<4x128xi32>
    %9 = arith.addi %8, %4 : vector<4x128xi32>
    %10 = vector.broadcast %2 : i32 to vector<4x128xi32>
    %11 = arith.addi %9, %10 : vector<4x128xi32>
    %c-1640531527_i32 = arith.constant -1640531527 : i32
    %12 = vector.broadcast %c-1640531527_i32 : i32 to vector<4x128xi32>
    %13 = arith.muli %11, %12 : vector<4x128xi32>
    %c16_i32 = arith.constant 16 : i32
    %14 = vector.broadcast %c16_i32 : i32 to vector<4x128xi32>
    %15 = arith.shrui %13, %14 : vector<4x128xi32>
    %16 = arith.xori %13, %15 : vector<4x128xi32>
    %c-2048144789_i32 = arith.constant -2048144789 : i32
    %17 = vector.broadcast %c-2048144789_i32 : i32 to vector<4x128xi32>
    %18 = arith.muli %16, %17 : vector<4x128xi32>
    %c1_i32 = arith.constant 1 : i32
    %19 = vector.broadcast %c1_i32 : i32 to vector<4x128xi32>
    %20 = arith.shrui %18, %19 : vector<4x128xi32>
    %c214748365_i32 = arith.constant 214748365 : i32
    %21 = vector.broadcast %c214748365_i32 : i32 to vector<4x128xi32>
    %22 = arith.cmpi sge, %20, %21 : vector<4x128xi32>
    %cst = arith.constant 1.11111116 : f32
    %23 = vector.broadcast %cst : f32 to vector<4x128xf32>
    %24 = arith.mulf %1, %23 : vector<4x128xf32>
    %cst_4 = arith.constant 0.000000e+00 : f32
    %25 = vector.broadcast %cst_4 : f32 to vector<4x128xf32>
    %26 = arith.select %22, %24, %25 : vector<4x128xi1>, vector<4x128xf32>
    %27 = arith.addf %0, %26 : vector<4x128xf32>
    %cst_5 = arith.constant dense<0.000000e+00> : vector<128xf32>
    %28 = vector.multi_reduction <add>, %27, %cst_5 [0] : vector<4x128xf32> to vector<128xf32>
    %29 = vector.shape_cast %28 : vector<128xf32> to vector<1x128xf32>
    %30 = arith.mulf %27, %27 : vector<4x128xf32>
    %cst_6 = arith.constant dense<0.000000e+00> : vector<128xf32>
    %31 = vector.multi_reduction <add>, %30, %cst_6 [0] : vector<4x128xf32> to vector<128xf32>
    %32 = vector.shape_cast %31 : vector<128xf32> to vector<1x128xf32>
    %33 = tpu.concatenate %29, %32 in 0 : vector<1x128xf32>, vector<1x128xf32> -> vector<2x128xf32>
    %34 = tpu.iota {dimensions = array<i32: 0>} : vector<128x128xi32>
    %35 = tpu.iota {dimensions = array<i32: 1>} : vector<128x128xi32>
    %c32_i32 = arith.constant 32 : i32
    %c0_i32_7 = arith.constant 0 : i32
    %36 = arith.cmpi eq, %c32_i32, %c0_i32_7 : i32
    %c1_i32_8 = arith.constant 1 : i32
    %37 = arith.select %36, %c1_i32_8, %c32_i32 : i32
    %38 = vector.broadcast %37 : i32 to vector<128x128xi32>
    %39 = arith.remsi %34, %38 : vector<128x128xi32>
    %c0_i32_9 = arith.constant 0 : i32
    %40 = vector.broadcast %c0_i32_9 : i32 to vector<128x128xi32>
    %41 = arith.cmpi ne, %39, %40 : vector<128x128xi32>
    %c0_i32_10 = arith.constant 0 : i32
    %42 = vector.broadcast %c0_i32_10 : i32 to vector<128x128xi32>
    %43 = arith.cmpi slt, %39, %42 : vector<128x128xi32>
    %c0_i32_11 = arith.constant 0 : i32
    %44 = arith.cmpi slt, %37, %c0_i32_11 : i32
    %45 = vector.broadcast %44 : i1 to vector<128x128xi1>
    %46 = vector.broadcast %45 : vector<128x128xi1> to vector<128x128xi1>
    %47 = arith.xori %43, %46 : vector<128x128xi1>
    %48 = arith.andi %47, %41 : vector<128x128xi1>
    %49 = vector.broadcast %37 : i32 to vector<128x128xi32>
    %50 = arith.addi %39, %49 : vector<128x128xi32>
    %51 = arith.select %48, %50, %39 : vector<128x128xi1>, vector<128x128xi32>
    %c32_i32_12 = arith.constant 32 : i32
    %c0_i32_13 = arith.constant 0 : i32
    %52 = arith.cmpi eq, %c32_i32_12, %c0_i32_13 : i32
    %c1_i32_14 = arith.constant 1 : i32
    %53 = arith.select %52, %c1_i32_14, %c32_i32_12 : i32
    %54 = vector.broadcast %53 : i32 to vector<128x128xi32>
    %55 = arith.remsi %35, %54 : vector<128x128xi32>
    %c0_i32_15 = arith.constant 0 : i32
    %56 = vector.broadcast %c0_i32_15 : i32 to vector<128x128xi32>
    %57 = arith.cmpi ne, %55, %56 : vector<128x128xi32>
    %c0_i32_16 = arith.constant 0 : i32
    %58 = vector.broadcast %c0_i32_16 : i32 to vector<128x128xi32>
    %59 = arith.cmpi slt, %55, %58 : vector<128x128xi32>
    %c0_i32_17 = arith.constant 0 : i32
    %60 = arith.cmpi slt, %53, %c0_i32_17 : i32
    %61 = vector.broadcast %60 : i1 to vector<128x128xi1>
    %62 = vector.broadcast %61 : vector<128x128xi1> to vector<128x128xi1>
    %63 = arith.xori %59, %62 : vector<128x128xi1>
    %64 = arith.andi %63, %57 : vector<128x128xi1>
    %65 = vector.broadcast %53 : i32 to vector<128x128xi32>
    %66 = arith.addi %55, %65 : vector<128x128xi32>
    %67 = arith.select %64, %66, %55 : vector<128x128xi1>, vector<128x128xi32>
    %68 = arith.cmpi eq, %51, %67 : vector<128x128xi32>
    %69 = arith.extui %68 : vector<128x128xi1> to vector<128x128xi32>
    %70 = arith.sitofp %69 : vector<128x128xi32> to vector<128x128xf32>
    %cst_18 = arith.constant dense<0.000000e+00> : vector<2x128xf32>
    %71 = tpu.matmul %33, %70, %cst_18 {dimension_numbers = #tpu.dot_dimension_numbers<[1], [0], [0], [1], [0, 0, 1, 1], [], []>} : vector<2x128xf32>, vector<128x128xf32>, vector<2x128xf32> -> vector<2x128xf32>
    %72 = vector.extract_strided_slice %71 {offsets = [0, 0], sizes = [1, 128], strides = [1, 1]} : vector<2x128xf32> to vector<1x128xf32>
    %cst_19 = arith.constant 6.250000e-02 : f32
    %73 = vector.broadcast %cst_19 : f32 to vector<1x128xf32>
    %74 = arith.mulf %72, %73 : vector<1x128xf32>
    %75 = vector.extract_strided_slice %71 {offsets = [1, 0], sizes = [1, 128], strides = [1, 1]} : vector<2x128xf32> to vector<1x128xf32>
    %cst_20 = arith.constant 6.250000e-02 : f32
    %76 = vector.broadcast %cst_20 : f32 to vector<1x128xf32>
    %77 = arith.mulf %75, %76 : vector<1x128xf32>
    %78 = arith.mulf %74, %74 : vector<1x128xf32>
    %79 = arith.subf %77, %78 : vector<1x128xf32>
    %cst_21 = arith.constant 0.000000e+00 : f32
    %80 = vector.broadcast %cst_21 : f32 to vector<1x128xf32>
    %81 = arith.maximumf %79, %80 : vector<1x128xf32>
    %cst_22 = arith.constant 9.99999974E-6 : f32
    %82 = vector.broadcast %cst_22 : f32 to vector<1x128xf32>
    %83 = arith.addf %81, %82 : vector<1x128xf32>
    %84 = math.rsqrt %83 : vector<1x128xf32>
    %c0_23 = arith.constant 0 : index
    %c0_24 = arith.constant 0 : index
    %85 = vector.load %arg4[%c0_23, %c0_24] : memref<2x128xf32, #tpu.memory_space<vmem>>, vector<1x128xf32>
    %86 = arith.mulf %85, %84 : vector<1x128xf32>
    %c1 = arith.constant 1 : index
    %c0_25 = arith.constant 0 : index
    %87 = vector.load %arg4[%c1, %c0_25] : memref<2x128xf32, #tpu.memory_space<vmem>>, vector<1x128xf32>
    %88 = arith.mulf %74, %86 : vector<1x128xf32>
    %89 = arith.subf %87, %88 : vector<1x128xf32>
    %90 = vector.broadcast %86 : vector<1x128xf32> to vector<4x128xf32>
    %91 = arith.mulf %27, %90 : vector<4x128xf32>
    %92 = vector.broadcast %89 : vector<1x128xf32> to vector<4x128xf32>
    %93 = arith.addf %91, %92 : vector<4x128xf32>
    %c0_26 = arith.constant 0 : index
    %c0_27 = arith.constant 0 : index
    %94 = vector.load %arg5[%c0_26, %c0_27] : memref<4x128xf32, #tpu.memory_space<vmem>>, vector<4x128xf32>
    tpu.vector_store %arg5[%c0_26, %c0_27], %93 {strides = array<i32>} : memref<4x128xf32, #tpu.memory_space<vmem>>, vector<4x128xf32>,
    return
  }
  func.func @transform_0(%arg0: i32, %arg1: memref<1xi32, #tpu.memory_space<smem>>) -> (i32, i32) {
    %c0_i32 = arith.constant 0 : i32
    %c0_i32_0 = arith.constant 0 : i32
    %c0_i32_1 = arith.constant 0 : i32
    return %c0_i32, %c0_i32_0 : i32, i32
  }
  func.func @transform_1(%arg0: i32, %arg1: memref<1xi32, #tpu.memory_space<smem>>) -> (i32, i32) {
    %c0_i32 = arith.constant 0 : i32
    %c0_i32_0 = arith.constant 0 : i32
    %c0_i32_1 = arith.constant 0 : i32
    return %c0_i32, %c0_i32_0 : i32, i32
  }
  func.func @transform_2(%arg0: i32, %arg1: memref<1xi32, #tpu.memory_space<smem>>) -> (i32, i32) {
    %c0_i32 = arith.constant 0 : i32
    %c0_i32_0 = arith.constant 0 : i32
    %c0_i32_1 = arith.constant 0 : i32
    return %c0_i32, %c0_i32_0 : i32, i32
  }
  func.func @transform_3(%arg0: i32, %arg1: memref<1xi32, #tpu.memory_space<smem>>) -> (i32, i32) {
    %c0_i32 = arith.constant 0 : i32
    %c0_i32_0 = arith.constant 0 : i32
    %c0_i32_1 = arith.constant 0 : i32
    return %c0_i32, %c0_i32_0 : i32, i32
  }
}

</mosaic_0001>

<llo_original>
// kernel: tpu_custom_call.1
$region0: #{tpu_custom_call.1}
  #allocation0 [shape = 'u32[]', space=smem, size = 0x4, offset = 0x4, fixed_abs, tag = 'smem constant byte address 0x4 - core index']
  #allocation1 [shape = 'u32[144,128]{1,0:T(1,128)}', space=vmem, size = 0x12000, scoped, tag = 'internal scratch']
  #allocation2 [shape = 's32[1]{0}', space=sflag, size = 0x4, scoped, tag = 'scoped memory for tpu_custom_call.1']
  #allocation3 [shape = 's32[1]{0:T(128)S(6)}', space=smem, size = 0x200, scoped, tag = 'prefetched SMEM operand 0']
  %s0 = inlined_call_operand.<no memory space> [shape: s32[1], index: 0, kind: input, shape index: {}]
  %s1 = inlined_call_operand.hbm [shape: f32[4,128], index: 1, kind: input, shape index: {}]
  %s2 = inlined_call_operand.vmem [shape: f32[4,128], index: 2, kind: input, shape index: {}]
  %s3 = inlined_call_operand.vmem [shape: f32[2,128], index: 3, kind: input, shape index: {}]
  %s4 = inlined_call_operand.hbm [shape: f32[4,128], index: 4, kind: output, shape index: {}]
  %s5 = sld [smem:[#allocation0]]
  $region26: #{tpu_custom_call.1} parent=0
    _
  %s7 = ssub.s32 1, %s5
  %s8 = scalar_select 0, %s7, %s5
  %9 = sst [smem:[#allocation3]] %s0
  $region1: #{tpu_custom_call.1} parent=0
    #allocation4 [shape = 'u8[2048]{0}', space=vmem, size = 0x800, scoped, tag = 'input window, operand 1, single buffered']
    #allocation5 [shape = 's32[1]{0}', space=sflag, size = 0x4, scoped, tag = 'scoped memory for tpu_custom_call.1']
    #allocation6 [shape = 's32[1]{0}', space=sflag, size = 0x4, scoped, tag = 'scoped memory for tpu_custom_call.1']
    #allocation7 [shape = 'u8[2048]{0}', space=vmem, size = 0x800, scoped, tag = 'output window, operand 0, single buffered']
    %10 = vsyncpa [#allocation5], 0
    %11 = vsyncpa [#allocation6], 0
    // Predicated region
    $region2: #{tpu_custom_call.1} parent=1 // pred_check
      _
    $region3: #{tpu_custom_call.1} parent=1 // pred_check_branch
      %13 = sbr.rel (0) target = $region5
    $region4: #{tpu_custom_call.1} parent=1 // pred_region
      %s15 = ssub.s32 64, 64
      %16 = vsyncadd [#allocation5], %s15
      %s18 = sshll.u32 [#allocation4], 4
      %s19 = int_to_ptr.vmem [resolvable:$true] %s18
      %21 = dma.hbm_to_vmem [thread:$0]  %s1, 64, %s19, [#allocation5]
    $region5: #{tpu_custom_call.1} parent=1 // pred_fallthru
      _
    // Predicated region
    $region6: #{tpu_custom_call.1} parent=1 // pred_check
      _
    $region7: #{tpu_custom_call.1} parent=1 // pred_check_branch
      %23 = sbr.rel (0) target = $region9
    $region8: #{tpu_custom_call.1} parent=1 // pred_region
      _
    $region9: #{tpu_custom_call.1} parent=1 // pred_fallthru
      _
    // Predicated region
    $region10: #{tpu_custom_call.1} parent=1 // pred_check
      _
    $region11: #{tpu_custom_call.1} parent=1 // pred_check_branch
      %25 = sbr.rel (0) target = $region13
    $region12: #{tpu_custom_call.1} parent=1 // pred_region
      _
    $region13: #{tpu_custom_call.1} parent=1 // pred_fallthru
      _
    // Predicated region
    $region14: #{tpu_custom_call.1} parent=1 // pred_check
      _
    $region15: #{tpu_custom_call.1} parent=1 // pred_check_branch
      %27 = sbr.rel (0) target = $region17
    $region16: #{tpu_custom_call.1} parent=1 // pred_region
      %28 = dma.done [#allocation5], 64
    $region17: #{tpu_custom_call.1} parent=1 // pred_fallthru
      _
    %v29 = vld [vmem:[#allocation4] sm:$0xf]
    %v30 = vld [vmem:[%s2] sm:$0xf]
    %s31 = sld [smem:[#allocation3]]
    %v32 = vlaneseq
    %v33 = vshrl.u32 %v32, 7
    %v34 = vlaneseq
    %v35 = vand.u32 %v34, 127
    %v36 = vmul.u32 %v33, 128
    %v37 = vadd.s32 %v36, %v35
    %v38 = vstv %s31
    %v39 = vadd.s32 %v37, %v38
    %v40 = vmul.u32 %v39, 2654435769
    %v41 = vshrl.u32 %v40, 16
    %v42 = vxor.u32 %v40, %v41
    %v43 = vmul.u32 %v42, 2246822507
    %v44 = vshrl.u32 %v43, 1
    %vm45 = vcmp.ge.s32.totalorder %v44, 214748365
    %v46 = vmul.f32 %v30, 1.1111112
    %v47 = vsel %vm45, %v46, 0.0
    %v48 = vadd.f32 %v29, %v47
    %vm49 = vcmask 1043456
    %v50 = vsel %vm49, %v48, 0.0
    %v51 = vrot.slane %v50, 4
    %v52 = vadd.f32 %v50, %v51
    %v53 = vrot.slane %v52, 2
    %v54 = vadd.f32 %v52, %v53
    %v55 = vrot.slane %v54, 1
    %v56 = vadd.f32 %v54, %v55
    %v57 = vmul.f32 %v48, %v48
    %v58 = vsel %vm49, %v57, 0.0
    %v59 = vrot.slane %v58, 4
    %v60 = vadd.f32 %v58, %v59
    %v61 = vrot.slane %v60, 2
    %v62 = vadd.f32 %v60, %v61
    %v63 = vrot.slane %v62, 1
    %v64 = vadd.f32 %v62, %v63
    %vm65 = vcmask 1040384
    %v66 = vsel %vm65, %v56, %v64
    %v67 = vadd.s32 %v33, 8
    %v68 = vadd.s32 %v33, 16
    %v69 = vadd.s32 %v33, 24
    %v70 = vadd.s32 %v33, 32
    %v71 = vadd.s32 %v33, 40
    %v72 = vadd.s32 %v33, 48
    %v73 = vadd.s32 %v33, 56
    %v74 = vadd.s32 %v33, 64
    %v75 = vadd.s32 %v33, 72
    %v76 = vadd.s32 %v33, 80
    %v77 = vadd.s32 %v33, 88
    %v78 = vadd.s32 %v33, 96
    %v79 = vadd.s32 %v33, 104
    %v80 = vadd.s32 %v33, 112
    %v81 = vadd.s32 %v33, 120
    %vm82 = vcmp.lt.s32.totalorder %v33, 0
    %v83 = vsub.s32 0, %v33
    %v84 = vsel %vm82, %v83, %v33
    %v85 = vshrl.u32 %v84, 5
    %v86 = vand.u32 %v84, 31
    %v87 = vsub.s32 0, %v86
    %v88 = vsel %vm82, %v87, %v86
    %vm89 = vcmp.lt.s32.totalorder %v67, 0
    %v90 = vsub.s32 0, %v67
    %v91 = vsel %vm89, %v90, %v67
    %v92 = vshrl.u32 %v91, 5
    %v93 = vand.u32 %v91, 31
    %v94 = vsub.s32 0, %v93
    %v95 = vsel %vm89, %v94, %v93
    %vm96 = vcmp.lt.s32.totalorder %v68, 0
    %v97 = vsub.s32 0, %v68
    %v98 = vsel %vm96, %v97, %v68
    %v99 = vshrl.u32 %v98, 5
    %v100 = vand.u32 %v98, 31
    %v101 = vsub.s32 0, %v100
    %v102 = vsel %vm96, %v101, %v100
    %vm103 = vcmp.lt.s32.totalorder %v69, 0
    %v104 = vsub.s32 0, %v69
    %v105 = vsel %vm103, %v104, %v69
    %v106 = vshrl.u32 %v105, 5
    %v107 = vand.u32 %v105, 31
    %v108 = vsub.s32 0, %v107
    %v109 = vsel %vm103, %v108, %v107
    %vm110 = vcmp.lt.s32.totalorder %v70, 0
    %v111 = vsub.s32 0, %v70
    %v112 = vsel %vm110, %v111, %v70
    %v113 = vshrl.u32 %v112, 5
    %v114 = vand.u32 %v112, 31
    %v115 = vsub.s32 0, %v114
    %v116 = vsel %vm110, %v115, %v114
    %vm117 = vcmp.lt.s32.totalorder %v71, 0
    %v118 = vsub.s32 0, %v71
    %v119 = vsel %vm117, %v118, %v71
    %v120 = vshrl.u32 %v119, 5
    %v121 = vand.u32 %v119, 31
    %v122 = vsub.s32 0, %v121
    %v123 = vsel %vm117, %v122, %v121
    %vm124 = vcmp.lt.s32.totalorder %v72, 0
    %v125 = vsub.s32 0, %v72
    %v126 = vsel %vm124, %v125, %v72
    %v127 = vshrl.u32 %v126, 5
    %v128 = vand.u32 %v126, 31
    %v129 = vsub.s32 0, %v128
    %v130 = vsel %vm124, %v129, %v128
    %vm131 = vcmp.lt.s32.totalorder %v73, 0
    %v132 = vsub.s32 0, %v73
    %v133 = vsel %vm131, %v132, %v73
    %v134 = vshrl.u32 %v133, 5
    %v135 = vand.u32 %v133, 31
    %v136 = vsub.s32 0, %v135
    %v137 = vsel %vm131, %v136, %v135
    %vm138 = vcmp.lt.s32.totalorder %v74, 0
    %v139 = vsub.s32 0, %v74
    %v140 = vsel %vm138, %v139, %v74
    %v141 = vshrl.u32 %v140, 5
    %v142 = vand.u32 %v140, 31
    %v143 = vsub.s32 0, %v142
    %v144 = vsel %vm138, %v143, %v142
    %vm145 = vcmp.lt.s32.totalorder %v75, 0
    %v146 = vsub.s32 0, %v75
    %v147 = vsel %vm145, %v146, %v75
    %v148 = vshrl.u32 %v147, 5
    %v149 = vand.u32 %v147, 31
    %v150 = vsub.s32 0, %v149
    %v151 = vsel %vm145, %v150, %v149
    %vm152 = vcmp.lt.s32.totalorder %v76, 0
    %v153 = vsub.s32 0, %v76
    %v154 = vsel %vm152, %v153, %v76
    %v155 = vshrl.u32 %v154, 5
    %v156 = vand.u32 %v154, 31
    %v157 = vsub.s32 0, %v156
    %v158 = vsel %vm152, %v157, %v156
    %vm159 = vcmp.lt.s32.totalorder %v77, 0
    %v160 = vsub.s32 0, %v77
    %v161 = vsel %vm159, %v160, %v77
    %v162 = vshrl.u32 %v161, 5
    %v163 = vand.u32 %v161, 31
    %v164 = vsub.s32 0, %v163
    %v165 = vsel %vm159, %v164, %v163
    %vm166 = vcmp.lt.s32.totalorder %v78, 0
    %v167 = vsub.s32 0, %v78
    %v168 = vsel %vm166, %v167, %v78
    %v169 = vshrl.u32 %v168, 5
    %v170 = vand.u32 %v168, 31
    %v171 = vsub.s32 0, %v170
    %v172 = vsel %vm166, %v171, %v170
    %vm173 = vcmp.lt.s32.totalorder %v79, 0
    %v174 = vsub.s32 0, %v79
    %v175 = vsel %vm173, %v174, %v79
    %v176 = vshrl.u32 %v175, 5
    %v177 = vand.u32 %v175, 31
    %v178 = vsub.s32 0, %v177
    %v179 = vsel %vm173, %v178, %v177
    %vm180 = vcmp.lt.s32.totalorder %v80, 0
    %v181 = vsub.s32 0, %v80
    %v182 = vsel %vm180, %v181, %v80
    %v183 = vshrl.u32 %v182, 5
    %v184 = vand.u32 %v182, 31
    %v185 = vsub.s32 0, %v184
    %v186 = vsel %vm180, %v185, %v184
    %vm187 = vcmp.lt.s32.totalorder %v81, 0
    %v188 = vsub.s32 0, %v81
    %v189 = vsel %vm187, %v188, %v81
    %v190 = vshrl.u32 %v189, 5
    %v191 = vand.u32 %v189, 31
    %v192 = vsub.s32 0, %v191
    %v193 = vsel %vm187, %v192, %v191
    %vm194 = vcmp.ne.s32.totalorder %v88, 0
    %vm195 = vcmp.ne.s32.totalorder %v95, 0
    %vm196 = vcmp.ne.s32.totalorder %v102, 0
    %vm197 = vcmp.ne.s32.totalorder %v109, 0
    %vm198 = vcmp.ne.s32.totalorder %v116, 0
    %vm199 = vcmp.ne.s32.totalorder %v123, 0
    %vm200 = vcmp.ne.s32.totalorder %v130, 0
    %vm201 = vcmp.ne.s32.totalorder %v137, 0
    %vm202 = vcmp.ne.s32.totalorder %v144, 0
    %vm203 = vcmp.ne.s32.totalorder %v151, 0
    %vm204 = vcmp.ne.s32.totalorder %v158, 0
    %vm205 = vcmp.ne.s32.totalorder %v165, 0
    %vm206 = vcmp.ne.s32.totalorder %v172, 0
    %vm207 = vcmp.ne.s32.totalorder %v179, 0
    %vm208 = vcmp.ne.s32.totalorder %v186, 0
    %vm209 = vcmp.ne.s32.totalorder %v193, 0
    %vm210 = vcmp.lt.s32.totalorder %v88, 0
    %vm211 = vcmp.lt.s32.totalorder %v95, 0
    %vm212 = vcmp.lt.s32.totalorder %v102, 0
    %vm213 = vcmp.lt.s32.totalorder %v109, 0
    %vm214 = vcmp.lt.s32.totalorder %v116, 0
    %vm215 = vcmp.lt.s32.totalorder %v123, 0
    %vm216 = vcmp.lt.s32.totalorder %v130, 0
    %vm217 = vcmp.lt.s32.totalorder %v137, 0
    %vm218 = vcmp.lt.s32.totalorder %v144, 0
    %vm219 = vcmp.lt.s32.totalorder %v151, 0
    %vm220 = vcmp.lt.s32.totalorder %v158, 0
    %vm221 = vcmp.lt.s32.totalorder %v165, 0
    %vm222 = vcmp.lt.s32.totalorder %v172, 0
    %vm223 = vcmp.lt.s32.totalorder %v179, 0
    %vm224 = vcmp.lt.s32.totalorder %v186, 0
    %vm225 = vcmp.lt.s32.totalorder %v193, 0
    %vm226 = vmand %vm210, %vm194
    %vm227 = vmand %vm211, %vm195
    %vm228 = vmand %vm212, %vm196
    %vm229 = vmand %vm213, %vm197
    %vm230 = vmand %vm214, %vm198
    %vm231 = vmand %vm215, %vm199
    %vm232 = vmand %vm216, %vm200
    %vm233 = vmand %vm217, %vm201
    %vm234 = vmand %vm218, %vm202
    %vm235 = vmand %vm219, %vm203
    %vm236 = vmand %vm220, %vm204
    %vm237 = vmand %vm221, %vm205
    %vm238 = vmand %vm222, %vm206
    %vm239 = vmand %vm223, %vm207
    %vm240 = vmand %vm224, %vm208
    %vm241 = vmand %vm225, %vm209
    %v242 = vadd.s32 %v88, 32
    %v243 = vadd.s32 %v95, 32
    %v244 = vadd.s32 %v102, 32
    %v245 = vadd.s32 %v109, 32
    %v246 = vadd.s32 %v116, 32
    %v247 = vadd.s32 %v123, 32
    %v248 = vadd.s32 %v130, 32
    %v249 = vadd.s32 %v137, 32
    %v250 = vadd.s32 %v144, 32
    %v251 = vadd.s32 %v151, 32
    %v252 = vadd.s32 %v158, 32
    %v253 = vadd.s32 %v165, 32
    %v254 = vadd.s32 %v172, 32
    %v255 = vadd.s32 %v179, 32
    %v256 = vadd.s32 %v186, 32
    %v257 = vadd.s32 %v193, 32
    %v258 = vsel %vm226, %v242, %v88
    %v259 = vsel %vm227, %v243, %v95
    %v260 = vsel %vm228, %v244, %v102
    %v261 = vsel %vm229, %v245, %v109
    %v262 = vsel %vm230, %v246, %v116
    %v263 = vsel %vm231, %v247, %v123
    %v264 = vsel %vm232, %v248, %v130
    %v265 = vsel %vm233, %v249, %v137
    %v266 = vsel %vm234, %v250, %v144
    %v267 = vsel %vm235, %v251, %v151
    %v268 = vsel %vm236, %v252, %v158
    %v269 = vsel %vm237, %v253, %v165
    %v270 = vsel %vm238, %v254, %v172
    %v271 = vsel %vm239, %v255, %v179
    %v272 = vsel %vm240, %v256, %v186
    %v273 = vsel %vm241, %v257, %v193
    %vm274 = vcmp.lt.s32.totalorder %v35, 0
    %v275 = vsub.s32 0, %v35
    %v276 = vsel %vm274, %v275, %v35
    %v277 = vshrl.u32 %v276, 5
    %v278 = vand.u32 %v276, 31
    %v279 = vsub.s32 0, %v278
    %v280 = vsel %vm274, %v279, %v278
    %vm281 = vcmp.ne.s32.totalorder %v280, 0
    %vm282 = vcmp.lt.s32.totalorder %v280, 0
    %vm283 = vmand %vm282, %vm281
    %v284 = vadd.s32 %v280, 32
    %v285 = vsel %vm283, %v284, %v280
    %vm286 = vcmp.eq.s32.totalorder %v258, %v285
    %vm287 = vcmp.eq.s32.totalorder %v259, %v285
    %vm288 = vcmp.eq.s32.totalorder %v260, %v285
    %vm289 = vcmp.eq.s32.totalorder %v261, %v285
    %vm290 = vcmp.eq.s32.totalorder %v262, %v285
    %vm291 = vcmp.eq.s32.totalorder %v263, %v285
    %vm292 = vcmp.eq.s32.totalorder %v264, %v285
    %vm293 = vcmp.eq.s32.totalorder %v265, %v285
    %vm294 = vcmp.eq.s32.totalorder %v266, %v285
    %vm295 = vcmp.eq.s32.totalorder %v267, %v285
    %vm296 = vcmp.eq.s32.totalorder %v268, %v285
    %vm297 = vcmp.eq.s32.totalorder %v269, %v285
    %vm298 = vcmp.eq.s32.totalorder %v270, %v285
    %vm299 = vcmp.eq.s32.totalorder %v271, %v285
    %vm300 = vcmp.eq.s32.totalorder %v272, %v285
    %vm301 = vcmp.eq.s32.totalorder %v273, %v285
    %v302 = vsel %vm286, 1, 0
    %v303 = vsel %vm287, 1, 0
    %v304 = vsel %vm288, 1, 0
    %v305 = vsel %vm289, 1, 0
    %v306 = vsel %vm290, 1, 0
    %v307 = vsel %vm291, 1, 0
    %v308 = vsel %vm292, 1, 0
    %v309 = vsel %vm293, 1, 0
    %v310 = vsel %vm294, 1, 0
    %v311 = vsel %vm295, 1, 0
    %v312 = vsel %vm296, 1, 0
    %v313 = vsel %vm297, 1, 0
    %v314 = vsel %vm298, 1, 0
    %v315 = vsel %vm299, 1, 0
    %v316 = vsel %vm300, 1, 0
    %v317 = vsel %vm301, 1, 0
    %v318 = vcvt.s32.f32 %v302
    %v319 = vcvt.s32.f32 %v303
    %v320 = vcvt.s32.f32 %v304
    %v321 = vcvt.s32.f32 %v305
    %v322 = vcvt.s32.f32 %v306
    %v323 = vcvt.s32.f32 %v307
    %v324 = vcvt.s32.f32 %v308
    %v325 = vcvt.s32.f32 %v309
    %v326 = vcvt.s32.f32 %v310
    %v327 = vcvt.s32.f32 %v311
    %v328 = vcvt.s32.f32 %v312
    %v329 = vcvt.s32.f32 %v313
    %v330 = vcvt.s32.f32 %v314
    %v331 = vcvt.s32.f32 %v315
    %v332 = vcvt.s32.f32 %v316
    %v333 = vcvt.s32.f32 %v317
    %334 = vmatprep.subr.mxu0 0.0
    %335 = vmatpush1.msra.mxu0 %v318
    %336 = vmatprep.subr.mxu0 0.0
    %337 = vmatpush1.msra.mxu0 %v319
    %338 = vmatprep.subr.mxu0 0.0
    %339 = vmatpush1.msra.mxu0 %v320
    %340 = vmatprep.subr.mxu0 0.0
    %341 = vmatpush1.msra.mxu0 %v321
    %342 = vmatprep.subr.mxu0 0.0
    %343 = vmatpush1.msra.mxu0 %v322
    %344 = vmatprep.subr.mxu0 0.0
    %345 = vmatpush1.msra.mxu0 %v323
    %346 = vmatprep.subr.mxu0 0.0
    %347 = vmatpush1.msra.mxu0 %v324
    %348 = vmatprep.subr.mxu0 0.0
    %349 = vmatpush1.msra.mxu0 %v325
    %350 = vmatprep.subr.mxu0 0.0
    %351 = vmatpush1.msra.mxu0 %v326
    %352 = vmatprep.subr.mxu0 0.0
    %353 = vmatpush1.msra.mxu0 %v327
    %354 = vmatprep.subr.mxu0 0.0
    %355 = vmatpush1.msra.mxu0 %v328
    %356 = vmatprep.subr.mxu0 0.0
    %357 = vmatpush1.msra.mxu0 %v329
    %358 = vmatprep.subr.mxu0 0.0
    %359 = vmatpush1.msra.mxu0 %v330
    %360 = vmatprep.subr.mxu0 0.0
    %361 = vmatpush1.msra.mxu0 %v331
    %362 = vmatprep.subr.mxu0 0.0
    %363 = vmatpush1.msra.mxu0 %v332
    %364 = vmatprep.subr.mxu0 0.0
    %365 = vmatpush1.msra.mxu0 %v333
    %366 = vmatprep.subr.mxu0 0.0
    %367 = vmatpush1.msra.mxu0 0.0
    %368 = vmatprep.subr.mxu0 0.0
    %369 = vmatpush1.msra.mxu0 0.0
    %370 = vmatprep.subr.mxu0 0.0
    %371 = vmatpush1.msra.mxu0 0.0
    %372 = vmatprep.subr.mxu0 0.0
    %373 = vmatpush1.msra.mxu0 0.0
    %374 = vmatprep.subr.mxu0 0.0
    %375 = vmatpush1.msra.mxu0 0.0
    %376 = vmatprep.subr.mxu0 0.0
    %377 = vmatpush1.msra.mxu0 0.0
    %378 = vmatprep.subr.mxu0 0.0
    %379 = vmatpush1.msra.mxu0 0.0
    %380 = vmatprep.subr.mxu0 0.0
    %381 = vmatpush1.msra.mxu0 0.0
    %382 = vmatprep.subr.mxu0 0.0
    %383 = vmatpush1.msra.mxu0 0.0
    %384 = vmatprep.subr.mxu0 0.0
    %385 = vmatpush1.msra.mxu0 0.0
    %386 = vmatprep.subr.mxu0 0.0
    %387 = vmatpush1.msra.mxu0 0.0
    %388 = vmatprep.subr.mxu0 0.0
    %389 = vmatpush1.msra.mxu0 0.0
    %390 = vmatprep.subr.mxu0 0.0
    %391 = vmatpush1.msra.mxu0 0.0
    %392 = vmatprep.subr.mxu0 0.0
    %393 = vmatpush1.msra.mxu0 0.0
    %394 = vmatprep.subr.mxu0 0.0
    %395 = vmatpush1.msra.mxu0 0.0
    %396 = vmatprep.subr.mxu0 0.0
    %397 = vmatpush1.msra.mxu0 0.0
    %398 = vmatprep.mubr.f32.mxu0 0.0
    %399 = vmatmul.mubr.f32.gmra.mrb[0].mxu0 %v66
    %v400 = vpop.f32.mrb[0].mxu0
    %v401 = vadd.f32 0.0, %v400
    %v402 = vpop.f32.mrb[0].mxu0
    %403 = vdwg.mxu0
    %v404 = vmul.f32 %v401, 0.0625
    %v405 = vmul.f32 %v404, %v404
    %v407 = vrot.slane %v405, 7
    %v409 = vsub.f32 %v404, %v407
    %v410 = vmax.f32 %v409, 0.0
    %v411 = vadd.f32 %v410, 1e-05
    %v412 = vrsqrt.pop %v411
    %v413 = vld [vmem:[%s3] sm:$0x1]
    %v415 = vrot.slane %v412, 1
    %v417 = vmul.f32 %v413, %v415
    %v418 = vld [vmem:[%s3 + $0x1] sm:$0x1]
    %v419 = vmul.f32 %v404, %v417
    %v420 = vsub.f32 %v418, %v419
    %v421 = vlaneseq
    %v422 = vshrl.u32 %v421, 7
    %v423 = vsub.s32 0, %v422
    %v424 = vrot.slane %v417, %v423
    %v425 = vmul.f32 %v48, %v424
    %v426 = vlaneseq
    %v427 = vshrl.u32 %v426, 7
    %v428 = vsub.s32 0, %v427
    %v429 = vrot.slane %v420, %v428
    %v430 = vadd.f32 %v425, %v429
    %431 = vst [vmem:[#allocation7] sm:$0xf] %v430
    // Predicated region
    $region18: #{tpu_custom_call.1} parent=1 // pred_check
      _
    $region19: #{tpu_custom_call.1} parent=1 // pred_check_branch
      %433 = sbr.rel (0) target = $region21
    $region20: #{tpu_custom_call.1} parent=1 // pred_region
      %s435 = ssub.s32 64, 64
      %436 = vsyncadd [#allocation6], %s435
      %s438 = sshll.u32 [#allocation7], 4
      %s439 = int_to_ptr.vmem [resolvable:$true] %s438
      %441 = dma.vmem_to_hbm [thread:$0]  %s439, 64, %s4, [#allocation6]
    $region21: #{tpu_custom_call.1} parent=1 // pred_fallthru
      _
    // Predicated region
    $region22: #{tpu_custom_call.1} parent=1 // pred_check
      _
    $region23: #{tpu_custom_call.1} parent=1 // pred_check_branch
      %443 = sbr.rel (0) target = $region25
    $region24: #{tpu_custom_call.1} parent=1 // pred_region
      %444 = dma.done [#allocation6], 64
    $region25: #{tpu_custom_call.1} parent=1 // pred_fallthru
      _
    %445 = vsyncpa [#allocation5], 1
    %446 = vsyncpa [#allocation6], 1

</llo_original>
